<compile_context>
chip_gen: v7x
topology: tpu7x:2x2x1
jax: 0.10.0
libtpu: 0.0.40
codegen_flags: <defaults>
</compile_context>

<pallas_src>
import functools

import jax
import jax.numpy as jnp
import numpy as np
from jax.experimental import pallas as pl
from jax.experimental.pallas import tpu as pltpu

# Fixed mapping from the reference module (22 nodes -> 6 areas); pure numpy,
# no device work at import time.
_NODE_TO_AREA = np.array(
    [0, 0, 0, 0, 0, 0, 0, 1, 2, 2, 3, 3, 3, 1, 4, 4, 4, 5, 5, 5, 1, 1],
    dtype=np.int32,
)
NUM_NODES = 22
NUM_AREAS = 6


def _loss_kernel(ab_ref, node_pred_ref, area_pred_ref, node_tgt_ref,
                 packed_ref, out_ref):
    alpha = ab_ref[0]                                   # f32 scalars from SMEM
    beta = ab_ref[1]

    x = node_pred_ref[...].astype(jnp.float32)          # (B, N) node logits
    a = area_pred_ref[...].astype(jnp.float32)          # (B, A) area logits
    nt = node_tgt_ref[...]                              # (B, 1) int32 targets
    packed = packed_ref[...]                            # (N, N + A) f32:
                                                        #   [:, :N]  node_dist
                                                        #   [:, N:]  node->area one-hot

    B, N = x.shape
    _, A = a.shape
    inv_B = jnp.float32(1.0 / B)

    # One-hot node targets.
    onehot_n = (jax.lax.broadcasted_iota(jnp.int32, (B, N), 1) == nt
                ).astype(jnp.float32)                   # (B, N)

    # Single MXU pass gathers node_dist[target] rows AND the area one-hot.
    # HIGHEST precision keeps node_dist at full f32 (one-hot side is exact
    # either way); the MXU is otherwise idle so the extra passes are free.
    gathered = jnp.dot(onehot_n, packed,
                       preferred_element_type=jnp.float32,
                       precision=jax.lax.Precision.HIGHEST)  # (B, N + A)
    dist_rows = gathered[:, :N]                         # node_dist[target]  (B, N)
    onehot_a = gathered[:, N:]                          # area one-hot       (B, A)

    # ---- cross entropy on node logits (reduction='mean') ----
    m = jnp.max(x, axis=1, keepdims=True)
    ex = jnp.exp(x - m)
    se = jnp.sum(ex, axis=1, keepdims=True)
    lse = jnp.log(se) + m                               # (B, 1)
    tgt_logit = jnp.sum(onehot_n * x, axis=1, keepdims=True)
    ce_node = jnp.sum(lse - tgt_logit) * inv_B

    # ---- cross entropy on area logits ----
    ma = jnp.max(a, axis=1, keepdims=True)
    exa = jnp.exp(a - ma)
    sea = jnp.sum(exa, axis=1, keepdims=True)
    lsea = jnp.log(sea) + ma
    tgt_a = jnp.sum(onehot_a * a, axis=1, keepdims=True)
    ce_area = jnp.sum(lsea - tgt_a) * inv_B

    # ---- distance penalty: mean_b sum_j softmax(x)[b,j] * dist[target_b, j] ----
    softmax = ex * pl.reciprocal(se, approx=True)       # EUP-slot reciprocal
    penalty = jnp.sum(softmax * dist_rows) * inv_B

    total = alpha * ce_node + beta * ce_area + jnp.float32(0.01) * penalty
    out_ref[0] = total                                  # scalar via SMEM


@jax.jit
def _distance_penalty_loss_impl(node_pred, area_pred, node_target,
                                packed_const, alpha_beta):
    B, N = node_pred.shape
    A = area_pred.shape[1]
    nt = node_target.astype(jnp.int32).reshape(B, 1)

    vmem = pl.BlockSpec(memory_space=pltpu.MemorySpace.VMEM)
    smem = pl.BlockSpec(memory_space=pltpu.MemorySpace.SMEM)

    cost = pl.CostEstimate(
        flops=2 * B * N * (N + A) + 16 * B * (N + A),
        transcendentals=B * (N + A) + 3 * B,
        bytes_accessed=4 * (B * N + B * A + B + N * (N + A) + 2 + 1),
    )

    out = pl.pallas_call(
        _loss_kernel,
        out_shape=jax.ShapeDtypeStruct((1,), jnp.float32),
        in_specs=[smem, vmem, vmem, vmem, vmem],
        out_specs=smem,
        cost_estimate=cost,
    )(alpha_beta, node_pred, area_pred, nt, packed_const)
    return out[0]


def _pack_constants(node_dist_matrix, node_to_area):
    """Concatenate node_dist (N,N) with the node->area one-hot (N,A) -> (N, N+A)."""
    node_dist = np.asarray(node_dist_matrix, dtype=np.float32)
    n2a = np.asarray(node_to_area, dtype=np.int64)
    n = node_dist.shape[0]
    num_areas = int(n2a.max()) + 1
    onehot = np.zeros((n, num_areas), dtype=np.float32)
    onehot[np.arange(n), n2a] = 1.0
    return np.concatenate([node_dist, onehot], axis=1)


def make_distance_penalty_loss(node_dist_matrix, area_dist_matrix=None,
                               node_to_area=_NODE_TO_AREA, alpha=1.0, beta=1.0):
    """JAX/Pallas equivalent of DistancePenaltyLoss.

    __init__-time work (constant packing + the single host->device uploads)
    happens once here; the returned callable matches forward(node_pred,
    area_pred, node_target) and does no per-call host transfers.
    """
    del area_dist_matrix  # stored but unused by the reference forward()
    packed = jnp.asarray(_pack_constants(node_dist_matrix, node_to_area),
                         dtype=jnp.float32)                     # one H2D, cached
    alpha_beta = jnp.asarray([alpha, beta], dtype=jnp.float32)  # one H2D, cached

    def loss_fn(node_pred, area_pred, node_target):
        return _distance_penalty_loss_impl(node_pred, area_pred, node_target,
                                           packed, alpha_beta)

    return loss_fn


def _reference(node_pred, area_pred, node_target, node_dist, node_to_area,
               alpha=1.0, beta=1.0):
    """Pure-JAX reference matching the PyTorch forward."""
    area_target = node_to_area[node_target]
    logp_n = jax.nn.log_softmax(node_pred, axis=1)
    ce_node = -jnp.mean(jnp.take_along_axis(logp_n, node_target[:, None], axis=1))
    logp_a = jax.nn.log_softmax(area_pred, axis=1)
    ce_area = -jnp.mean(jnp.take_along_axis(logp_a, area_target[:, None], axis=1))
    sm = jax.nn.softmax(node_pred, axis=1)
    penalty = jnp.mean(jnp.sum(sm * node_dist[node_target], axis=1))
    return alpha * ce_node + beta * ce_area + 0.01 * penalty


if __name__ == "__main__":
    key = jax.random.PRNGKey(0)
    k1, k2, k3, k4, k5 = jax.random.split(key, 5)

    B = 8

    # Deterministic synthetic "distance matrices" (module __init__ args):
    # symmetric, non-negative, zero diagonal.
    raw_n = jax.random.uniform(k4, (NUM_NODES, NUM_NODES), dtype=jnp.float32)
    node_dist = (raw_n + raw_n.T) * (1.0 - jnp.eye(NUM_NODES, dtype=jnp.float32))
    raw_a = jax.random.uniform(k5, (NUM_AREAS, NUM_AREAS), dtype=jnp.float32)
    area_dist = (raw_a + raw_a.T) * (1.0 - jnp.eye(NUM_AREAS, dtype=jnp.float32))

    # Inputs
    node_pred = jax.random.normal(k1, (B, NUM_NODES), dtype=jnp.float32)
    area_pred = jax.random.normal(k2, (B, NUM_AREAS), dtype=jnp.float32)
    node_target = jax.random.randint(k3, (B,), 0, NUM_NODES, dtype=jnp.int32)

    # "Module construction": constants packed + uploaded exactly once.
    loss_fn = make_distance_penalty_loss(np.asarray(node_dist),
                                         np.asarray(area_dist),
                                         _NODE_TO_AREA, alpha=1.0, beta=1.0)

    loss = loss_fn(node_pred, area_pred, node_target)
    loss = jax.block_until_ready(loss)

    ref = _reference(node_pred, area_pred, node_target, node_dist,
                     jnp.asarray(_NODE_TO_AREA))
    # Tolerance covers the approx (EUP) reciprocal in the 0.01-scaled penalty;
    # with the HIGHEST-precision dist gather the residual error is << 1e-4.
    np.testing.assert_allclose(np.asarray(loss), np.asarray(ref),
                               rtol=1e-4, atol=1e-4)

    print("KERNEL_OK")
</pallas_src>

<mosaic_0001>
module attributes {stable_mosaic.version = 11 : i64} {
  func.func @_loss_kernel(%arg0: memref<2xf32, #tpu.memory_space<smem>>, %arg1: memref<8x22xf32, #tpu.memory_space<vmem>>, %arg2: memref<8x6xf32, #tpu.memory_space<vmem>>, %arg3: memref<8x1xi32, #tpu.memory_space<vmem>>, %arg4: memref<22x28xf32, #tpu.memory_space<vmem>>, %arg5: memref<1xf32, #tpu.memory_space<smem>>) attributes {dimension_semantics = [], scalar_prefetch = 0 : i64, scratch_operands = 0 : i64, tpu.core_type = #tpu.core_type<tc>} {
    %c0 = arith.constant 0 : index
    %0 = memref.load %arg0[%c0] : memref<2xf32, #tpu.memory_space<smem>>
    %c1 = arith.constant 1 : index
    %1 = memref.load %arg0[%c1] : memref<2xf32, #tpu.memory_space<smem>>
    %c0_0 = arith.constant 0 : index
    %c0_1 = arith.constant 0 : index
    %2 = vector.load %arg1[%c0_0, %c0_1] : memref<8x22xf32, #tpu.memory_space<vmem>>, vector<8x22xf32>
    %c0_2 = arith.constant 0 : index
    %c0_3 = arith.constant 0 : index
    %3 = vector.load %arg2[%c0_2, %c0_3] : memref<8x6xf32, #tpu.memory_space<vmem>>, vector<8x6xf32>
    %c0_4 = arith.constant 0 : index
    %c0_5 = arith.constant 0 : index
    %4 = vector.load %arg3[%c0_4, %c0_5] : memref<8x1xi32, #tpu.memory_space<vmem>>, vector<8x1xi32>
    %c0_6 = arith.constant 0 : index
    %c0_7 = arith.constant 0 : index
    %5 = vector.load %arg4[%c0_6, %c0_7] : memref<22x28xf32, #tpu.memory_space<vmem>>, vector<22x28xf32>
    %6 = tpu.iota {dimensions = array<i32: 1>} : vector<8x22xi32>
    %7 = vector.broadcast %4 : vector<8x1xi32> to vector<8x22xi32>
    %8 = arith.cmpi eq, %6, %7 : vector<8x22xi32>
    %9 = arith.extui %8 : vector<8x22xi1> to vector<8x22xi32>
    %10 = arith.sitofp %9 : vector<8x22xi32> to vector<8x22xf32>
    %cst = arith.constant dense<0.000000e+00> : vector<8x28xf32>
    %11 = tpu.matmul %10, %5, %cst {dimension_numbers = #tpu.dot_dimension_numbers<[1], [0], [0], [1], [0, 0, 1, 1], [], []>, precision = #tpu.contract_precision<fp32>} : vector<8x22xf32>, vector<22x28xf32>, vector<8x28xf32> -> vector<8x28xf32>
    %12 = vector.extract_strided_slice %11 {offsets = [0, 0], sizes = [8, 22], strides = [1, 1]} : vector<8x28xf32> to vector<8x22xf32>
    %13 = vector.extract_strided_slice %11 {offsets = [0, 22], sizes = [8, 6], strides = [1, 1]} : vector<8x28xf32> to vector<8x6xf32>
    %cst_8 = arith.constant dense<0xFF800000> : vector<8xf32>
    %14 = vector.multi_reduction <maximumf>, %2, %cst_8 [1] : vector<8x22xf32> to vector<8xf32>
    %15 = vector.shape_cast %14 : vector<8xf32> to vector<8x1xf32>
    %16 = vector.broadcast %15 : vector<8x1xf32> to vector<8x22xf32>
    %17 = arith.subf %2, %16 : vector<8x22xf32>
    %18 = math.exp %17 : vector<8x22xf32>
    %cst_9 = arith.constant dense<0.000000e+00> : vector<8xf32>
    %19 = vector.multi_reduction <add>, %18, %cst_9 [1] : vector<8x22xf32> to vector<8xf32>
    %20 = vector.shape_cast %19 : vector<8xf32> to vector<8x1xf32>
    %21 = math.log %20 : vector<8x1xf32>
    %22 = arith.addf %21, %15 : vector<8x1xf32>
    %23 = arith.mulf %10, %2 : vector<8x22xf32>
    %cst_10 = arith.constant dense<0.000000e+00> : vector<8xf32>
    %24 = vector.multi_reduction <add>, %23, %cst_10 [1] : vector<8x22xf32> to vector<8xf32>
    %25 = vector.shape_cast %24 : vector<8xf32> to vector<8x1xf32>
    %26 = arith.subf %22, %25 : vector<8x1xf32>
    %27 = vector.shape_cast %26 : vector<8x1xf32> to vector<1x8x1xf32>
    %cst_11 = arith.constant dense<0.000000e+00> : vector<1xf32>
    %28 = vector.multi_reduction <add>, %27, %cst_11 [1, 2] : vector<1x8x1xf32> to vector<1xf32>
    %29 = vector.shape_cast %28 : vector<1xf32> to vector<1x1x1xf32>
    %30 = vector.extract %29[0, 0, 0] : f32 from vector<1x1x1xf32>
    %cst_12 = arith.constant 1.250000e-01 : f32
    %31 = arith.mulf %30, %cst_12 : f32
    %cst_13 = arith.constant dense<0xFF800000> : vector<8xf32>
    %32 = vector.multi_reduction <maximumf>, %3, %cst_13 [1] : vector<8x6xf32> to vector<8xf32>
    %33 = vector.shape_cast %32 : vector<8xf32> to vector<8x1xf32>
    %34 = vector.broadcast %33 : vector<8x1xf32> to vector<8x6xf32>
    %35 = arith.subf %3, %34 : vector<8x6xf32>
    %36 = math.exp %35 : vector<8x6xf32>
    %cst_14 = arith.constant dense<0.000000e+00> : vector<8xf32>
    %37 = vector.multi_reduction <add>, %36, %cst_14 [1] : vector<8x6xf32> to vector<8xf32>
    %38 = vector.shape_cast %37 : vector<8xf32> to vector<8x1xf32>
    %39 = math.log %38 : vector<8x1xf32>
    %40 = arith.addf %39, %33 : vector<8x1xf32>
    %41 = arith.mulf %13, %3 : vector<8x6xf32>
    %cst_15 = arith.constant dense<0.000000e+00> : vector<8xf32>
    %42 = vector.multi_reduction <add>, %41, %cst_15 [1] : vector<8x6xf32> to vector<8xf32>
    %43 = vector.shape_cast %42 : vector<8xf32> to vector<8x1xf32>
    %44 = arith.subf %40, %43 : vector<8x1xf32>
    %45 = vector.shape_cast %44 : vector<8x1xf32> to vector<1x8x1xf32>
    %cst_16 = arith.constant dense<0.000000e+00> : vector<1xf32>
    %46 = vector.multi_reduction <add>, %45, %cst_16 [1, 2] : vector<1x8x1xf32> to vector<1xf32>
    %47 = vector.shape_cast %46 : vector<1xf32> to vector<1x1x1xf32>
    %48 = vector.extract %47[0, 0, 0] : f32 from vector<1x1x1xf32>
    %cst_17 = arith.constant 1.250000e-01 : f32
    %49 = arith.mulf %48, %cst_17 : f32
    %50 = tpu.reciprocal %20 {approx = true} : vector<8x1xf32> -> vector<8x1xf32>
    %51 = vector.broadcast %50 : vector<8x1xf32> to vector<8x22xf32>
    %52 = arith.mulf %18, %51 : vector<8x22xf32>
    %53 = arith.mulf %52, %12 : vector<8x22xf32>
    %54 = vector.shape_cast %53 : vector<8x22xf32> to vector<1x8x22xf32>
    %cst_18 = arith.constant dense<0.000000e+00> : vector<1xf32>
    %55 = vector.multi_reduction <add>, %54, %cst_18 [1, 2] : vector<1x8x22xf32> to vector<1xf32>
    %56 = vector.shape_cast %55 : vector<1xf32> to vector<1x1x1xf32>
    %57 = vector.extract %56[0, 0, 0] : f32 from vector<1x1x1xf32>
    %cst_19 = arith.constant 1.250000e-01 : f32
    %58 = arith.mulf %57, %cst_19 : f32
    %59 = arith.mulf %0, %31 : f32
    %60 = arith.mulf %1, %49 : f32
    %61 = arith.addf %59, %60 : f32
    %cst_20 = arith.constant 0.00999999977 : f32
    %62 = arith.mulf %cst_20, %58 : f32
    %63 = arith.addf %61, %62 : f32
    %c0_21 = arith.constant 0 : index
    %64 = memref.load %arg5[%c0_21] : memref<1xf32, #tpu.memory_space<smem>>
    memref.store %63, %arg5[%c0_21] : memref<1xf32, #tpu.memory_space<smem>>
    return
  }
}

</mosaic_0001>

<llo_original>
// kernel: _distance_penalty_loss_impl.1
$region0: #{_distance_penalty_loss_impl.1}
  #allocation0 [shape = 'u32[]', space=smem, size = 0x4, offset = 0x4, fixed_abs, tag = 'smem constant byte address 0x4 - core index']
  #allocation1 [shape = 'u32[144,128]{1,0:T(1,128)}', space=vmem, size = 0x12000, scoped, tag = 'internal scratch']
  %s0 = inlined_call_operand.vmem [shape: f32[2], index: 0, kind: input, shape index: {}]
  %s1 = inlined_call_operand.hbm [shape: f32[8,22], index: 1, kind: input, shape index: {}]
  %s2 = inlined_call_operand.hbm [shape: f32[8,6], index: 2, kind: input, shape index: {}]
  %s3 = inlined_call_operand.vmem [shape: s32[8,1], index: 3, kind: input, shape index: {}]
  %s4 = inlined_call_operand.vmem [shape: f32[22,28], index: 4, kind: input, shape index: {}]
  %s5 = inlined_call_operand.hbm [shape: f32[1], index: 5, kind: output, shape index: {}]
  %s6 = sld [smem:[#allocation0]]
  $region42: #{_distance_penalty_loss_impl.1} parent=0
    _
  %s8 = ssub.s32 1, %s6
  %s9 = scalar_select 0, %s8, %s6
  $region1: #{_distance_penalty_loss_impl.1} parent=0
    #allocation2 [shape = 'u8[512]{0}', space=smem, size = 0x200, scoped, tag = 'input window, operand 0, single buffered']
    #allocation3 [shape = 's32[1]{0}', space=sflag, size = 0x4, scoped, tag = 'scoped memory for _distance_penalty_loss_impl.1']
    #allocation4 [shape = 's32[1]{0}', space=sflag, size = 0x4, scoped, tag = 'scoped memory for _distance_penalty_loss_impl.1']
    #allocation5 [shape = 's32[1]{0}', space=sflag, size = 0x4, scoped, tag = 'scoped memory for _distance_penalty_loss_impl.1']
    #allocation6 [shape = 'u8[4096]{0}', space=vmem, size = 0x1000, scoped, tag = 'input window, operand 1, single buffered']
    #allocation7 [shape = 'u8[4096]{0}', space=vmem, size = 0x1000, scoped, tag = 'input window, operand 2, single buffered']
    #allocation8 [shape = 's32[1]{0}', space=sflag, size = 0x4, scoped, tag = 'scoped memory for _distance_penalty_loss_impl.1']
    #allocation9 [shape = 'u8[512]{0}', space=smem, size = 0x200, scoped, tag = 'output window, operand 0, single buffered']
    %10 = vsyncpa [#allocation5], 0
    %11 = vsyncpa [#allocation3], 0
    %12 = vsyncpa [#allocation8], 0
    %13 = vsyncpa [#allocation4], 0
    // Predicated region
    $region2: #{_distance_penalty_loss_impl.1} parent=1 // pred_check
      _
    $region3: #{_distance_penalty_loss_impl.1} parent=1 // pred_check_branch
      %15 = sbr.rel (0) target = $region5
    $region4: #{_distance_penalty_loss_impl.1} parent=1 // pred_region
      %s17 = ssub.s32 16, 16
      %18 = vsyncadd [#allocation5], %s17
      %s20 = sshll.u32 %s0, 4
      %s21 = int_to_ptr.vmem [resolvable:$true] %s20
      %23 = dma.vmem_to_smem %s21, 16, [#allocation2], [#allocation5]
    $region5: #{_distance_penalty_loss_impl.1} parent=1 // pred_fallthru
      _
    // Predicated region
    $region6: #{_distance_penalty_loss_impl.1} parent=1 // pred_check
      _
    $region7: #{_distance_penalty_loss_impl.1} parent=1 // pred_check_branch
      %25 = sbr.rel (0) target = $region9
    $region8: #{_distance_penalty_loss_impl.1} parent=1 // pred_region
      %s27 = ssub.s32 128, 128
      %28 = vsyncadd [#allocation3], %s27
      %s30 = sshll.u32 [#allocation6], 4
      %s31 = int_to_ptr.vmem [resolvable:$true] %s30
      %33 = dma.hbm_to_vmem [thread:$0]  %s1, 128, %s31, [#allocation3]
    $region9: #{_distance_penalty_loss_impl.1} parent=1 // pred_fallthru
      _
    // Predicated region
    $region10: #{_distance_penalty_loss_impl.1} parent=1 // pred_check
      _
    $region11: #{_distance_penalty_loss_impl.1} parent=1 // pred_check_branch
      %35 = sbr.rel (0) target = $region13
    $region12: #{_distance_penalty_loss_impl.1} parent=1 // pred_region
      %s37 = ssub.s32 128, 128
      %38 = vsyncadd [#allocation8], %s37
      %s40 = sshll.u32 [#allocation7], 4
      %s41 = int_to_ptr.vmem [resolvable:$true] %s40
      %43 = dma.hbm_to_vmem [thread:$0]  %s2, 128, %s41, [#allocation8]
    $region13: #{_distance_penalty_loss_impl.1} parent=1 // pred_fallthru
      _
    // Predicated region
    $region14: #{_distance_penalty_loss_impl.1} parent=1 // pred_check
      _
    $region15: #{_distance_penalty_loss_impl.1} parent=1 // pred_check_branch
      %45 = sbr.rel (0) target = $region17
    $region16: #{_distance_penalty_loss_impl.1} parent=1 // pred_region
      _
    $region17: #{_distance_penalty_loss_impl.1} parent=1 // pred_fallthru
      _
    // Predicated region
    $region18: #{_distance_penalty_loss_impl.1} parent=1 // pred_check
      _
    $region19: #{_distance_penalty_loss_impl.1} parent=1 // pred_check_branch
      %47 = sbr.rel (0) target = $region21
    $region20: #{_distance_penalty_loss_impl.1} parent=1 // pred_region
      _
    $region21: #{_distance_penalty_loss_impl.1} parent=1 // pred_fallthru
      _
    // Predicated region
    $region22: #{_distance_penalty_loss_impl.1} parent=1 // pred_check
      _
    $region23: #{_distance_penalty_loss_impl.1} parent=1 // pred_check_branch
      %49 = sbr.rel (0) target = $region25
    $region24: #{_distance_penalty_loss_impl.1} parent=1 // pred_region
      %50 = dma.done [#allocation5], 16
    $region25: #{_distance_penalty_loss_impl.1} parent=1 // pred_fallthru
      _
    // Predicated region
    $region26: #{_distance_penalty_loss_impl.1} parent=1 // pred_check
      _
    $region27: #{_distance_penalty_loss_impl.1} parent=1 // pred_check_branch
      %52 = sbr.rel (0) target = $region29
    $region28: #{_distance_penalty_loss_impl.1} parent=1 // pred_region
      %53 = dma.done [#allocation3], 128
    $region29: #{_distance_penalty_loss_impl.1} parent=1 // pred_fallthru
      _
    // Predicated region
    $region30: #{_distance_penalty_loss_impl.1} parent=1 // pred_check
      _
    $region31: #{_distance_penalty_loss_impl.1} parent=1 // pred_check_branch
      %55 = sbr.rel (0) target = $region33
    $region32: #{_distance_penalty_loss_impl.1} parent=1 // pred_region
      %56 = dma.done [#allocation8], 128
    $region33: #{_distance_penalty_loss_impl.1} parent=1 // pred_fallthru
      _
    %57 = sfence
    %s58 = sld [smem:[#allocation2]]
    %s59 = sld [smem:[#allocation2 + $0x1]]
    %v60 = vld [vmem:[#allocation6] sm:$0xff]
    %v61 = vld [vmem:[#allocation7] sm:$0xff]
    %v62 = vld [vmem:[%s3] sm:$0xff]
    %v63 = vld [vmem:[%s4] sm:$0xff]
    %v64 = vld [vmem:[%s4 + $0x8] sm:$0xff]
    %v65 = vld [vmem:[%s4 + $0x10] sm:$0x3f]
    %v66 = vlaneseq
    %v67 = vand.u32 %v66, 127
    %68 = vset.pattern.permute.xlu0 0
    %69 = vperm.xlu0 %68, %v62
    %v70 = vpop.permute.xlu0 %69
    %vm71 = vcmp.eq.s32.totalorder %v67, %v70
    %v72 = vsel %vm71, 1, 0
    %v73 = vcvt.s32.f32 %v72
    %vm74 = vcmask 179200
    %v76 = vsel %vm74, %v73, 0
    %vm78 = vcmask 1045504
    %v80 = vsel %vm78, %v65, 0
    %82 = vmatprep.subr.mxu0 0.0
    %v83 = vand.u32 %v63, 4294901760
    %84 = vmatpush1.msra.mxu0 %v83
    %85 = vmatprep.subr.mxu0 0.0
    %v86 = vand.u32 %v64, 4294901760
    %87 = vmatpush1.msra.mxu0 %v86
    %88 = vmatprep.subr.mxu0 0.0
    %v89 = vand.u32 %v80, 4294901760
    %90 = vmatpush1.msra.mxu0 %v89
    %91 = vmatprep.subr.mxu0 0.0
    %92 = vmatpush1.msra.mxu0 0.0
    %93 = vmatprep.subr.mxu0 0.0
    %94 = vmatpush1.msra.mxu0 0.0
    %95 = vmatprep.subr.mxu0 0.0
    %96 = vmatpush1.msra.mxu0 0.0
    %97 = vmatprep.subr.mxu0 0.0
    %98 = vmatpush1.msra.mxu0 0.0
    %99 = vmatprep.subr.mxu0 0.0
    %100 = vmatpush1.msra.mxu0 0.0
    %101 = vmatprep.subr.mxu0 0.0
    %102 = vmatpush1.msra.mxu0 0.0
    %103 = vmatprep.subr.mxu0 0.0
    %104 = vmatpush1.msra.mxu0 0.0
    %105 = vmatprep.subr.mxu0 0.0
    %106 = vmatpush1.msra.mxu0 0.0
    %107 = vmatprep.subr.mxu0 0.0
    %108 = vmatpush1.msra.mxu0 0.0
    %109 = vmatprep.subr.mxu0 0.0
    %110 = vmatpush1.msra.mxu0 0.0
    %111 = vmatprep.subr.mxu0 0.0
    %112 = vmatpush1.msra.mxu0 0.0
    %113 = vmatprep.subr.mxu0 0.0
    %114 = vmatpush1.msra.mxu0 0.0
    %115 = vmatprep.subr.mxu0 0.0
    %116 = vmatpush1.msra.mxu0 0.0
    %117 = vmatprep.subr.mxu0 0.0
    %118 = vmatpush1.msra.mxu0 0.0
    %119 = vmatprep.subr.mxu0 0.0
    %120 = vmatpush1.msra.mxu0 0.0
    %121 = vmatprep.subr.mxu0 0.0
    %122 = vmatpush1.msra.mxu0 0.0
    %123 = vmatprep.subr.mxu0 0.0
    %124 = vmatpush1.msra.mxu0 0.0
    %125 = vmatprep.subr.mxu0 0.0
    %126 = vmatpush1.msra.mxu0 0.0
    %127 = vmatprep.subr.mxu0 0.0
    %128 = vmatpush1.msra.mxu0 0.0
    %129 = vmatprep.subr.mxu0 0.0
    %130 = vmatpush1.msra.mxu0 0.0
    %131 = vmatprep.subr.mxu0 0.0
    %132 = vmatpush1.msra.mxu0 0.0
    %133 = vmatprep.subr.mxu0 0.0
    %134 = vmatpush1.msra.mxu0 0.0
    %135 = vmatprep.subr.mxu0 0.0
    %136 = vmatpush1.msra.mxu0 0.0
    %137 = vmatprep.subr.mxu0 0.0
    %138 = vmatpush1.msra.mxu0 0.0
    %139 = vmatprep.subr.mxu0 0.0
    %140 = vmatpush1.msra.mxu0 0.0
    %141 = vmatprep.subr.mxu0 0.0
    %142 = vmatpush1.msra.mxu0 0.0
    %143 = vmatprep.subr.mxu0 0.0
    %144 = vmatpush1.msra.mxu0 0.0
    %145 = vmatprep.subr.mxu0 0.0
    %146 = vmatpush1.msra.mxu0 0.0
    %147 = vmatprep.subr.mxu0 0.0
    %148 = vmatpush1.msra.mxu0 0.0
    %149 = vmatprep.mubr.f32.mxu0 0.0
    %v150 = vand.u32 %v76, 4294901760
    %v151 = vsub.f32 %v76, %v150
    %v152 = vand.u32 %v151, 4294901760
    %v153 = vsub.f32 %v151, %v152
    %v154 = vand.u32 %v153, 4294901760
    %155 = vmatmul.mubr.f32.gmra.mrb[0].mxu0 %v154
    %v156 = vpop.f32.mrb[0].mxu0
    %v157 = vadd.f32 0.0, %v156
    %v158 = vpop.f32.mrb[0].mxu0
    %159 = vdwg.mxu0
    %160 = vmatprep.subr.mxu0 0.0
    %v161 = vand.u32 %v63, 4294901760
    %v162 = vsub.f32 %v63, %v161
    %v163 = vand.u32 %v162, 4294901760
    %v164 = vsub.f32 %v162, %v163
    %v165 = vand.u32 %v164, 4294901760
    %166 = vmatpush1.msra.mxu0 %v165
    %167 = vmatprep.subr.mxu0 0.0
    %v168 = vand.u32 %v64, 4294901760
    %v169 = vsub.f32 %v64, %v168
    %v170 = vand.u32 %v169, 4294901760
    %v171 = vsub.f32 %v169, %v170
    %v172 = vand.u32 %v171, 4294901760
    %173 = vmatpush1.msra.mxu0 %v172
    %174 = vmatprep.subr.mxu0 0.0
    %v175 = vand.u32 %v80, 4294901760
    %v176 = vsub.f32 %v80, %v175
    %v177 = vand.u32 %v176, 4294901760
    %v178 = vsub.f32 %v176, %v177
    %v179 = vand.u32 %v178, 4294901760
    %180 = vmatpush1.msra.mxu0 %v179
    %181 = vmatprep.subr.mxu0 0.0
    %182 = vmatpush1.msra.mxu0 0.0
    %183 = vmatprep.subr.mxu0 0.0
    %184 = vmatpush1.msra.mxu0 0.0
    %185 = vmatprep.subr.mxu0 0.0
    %186 = vmatpush1.msra.mxu0 0.0
    %187 = vmatprep.subr.mxu0 0.0
    %188 = vmatpush1.msra.mxu0 0.0
    %189 = vmatprep.subr.mxu0 0.0
    %190 = vmatpush1.msra.mxu0 0.0
    %191 = vmatprep.subr.mxu0 0.0
    %192 = vmatpush1.msra.mxu0 0.0
    %193 = vmatprep.subr.mxu0 0.0
    %194 = vmatpush1.msra.mxu0 0.0
    %195 = vmatprep.subr.mxu0 0.0
    %196 = vmatpush1.msra.mxu0 0.0
    %197 = vmatprep.subr.mxu0 0.0
    %198 = vmatpush1.msra.mxu0 0.0
    %199 = vmatprep.subr.mxu0 0.0
    %200 = vmatpush1.msra.mxu0 0.0
    %201 = vmatprep.subr.mxu0 0.0
    %202 = vmatpush1.msra.mxu0 0.0
    %203 = vmatprep.subr.mxu0 0.0
    %204 = vmatpush1.msra.mxu0 0.0
    %205 = vmatprep.subr.mxu0 0.0
    %206 = vmatpush1.msra.mxu0 0.0
    %207 = vmatprep.subr.mxu0 0.0
    %208 = vmatpush1.msra.mxu0 0.0
    %209 = vmatprep.subr.mxu0 0.0
    %210 = vmatpush1.msra.mxu0 0.0
    %211 = vmatprep.subr.mxu0 0.0
    %212 = vmatpush1.msra.mxu0 0.0
    %213 = vmatprep.subr.mxu0 0.0
    %214 = vmatpush1.msra.mxu0 0.0
    %215 = vmatprep.subr.mxu0 0.0
    %216 = vmatpush1.msra.mxu0 0.0
    %217 = vmatprep.subr.mxu0 0.0
    %218 = vmatpush1.msra.mxu0 0.0
    %219 = vmatprep.subr.mxu0 0.0
    %220 = vmatpush1.msra.mxu0 0.0
    %221 = vmatprep.subr.mxu0 0.0
    %222 = vmatpush1.msra.mxu0 0.0
    %223 = vmatprep.subr.mxu0 0.0
    %224 = vmatpush1.msra.mxu0 0.0
    %225 = vmatprep.subr.mxu0 0.0
    %226 = vmatpush1.msra.mxu0 0.0
    %227 = vmatprep.subr.mxu0 0.0
    %228 = vmatpush1.msra.mxu0 0.0
    %229 = vmatprep.subr.mxu0 0.0
    %230 = vmatpush1.msra.mxu0 0.0
    %231 = vmatprep.subr.mxu0 0.0
    %232 = vmatpush1.msra.mxu0 0.0
    %233 = vmatprep.subr.mxu0 0.0
    %234 = vmatpush1.msra.mxu0 0.0
    %235 = vmatprep.subr.mxu0 0.0
    %236 = vmatpush1.msra.mxu0 0.0
    %237 = vmatprep.subr.mxu0 0.0
    %238 = vmatpush1.msra.mxu0 0.0
    %239 = vmatprep.mubr.f32.mxu0 0.0
    %v240 = vand.u32 %v76, 4294901760
    %241 = vmatmul.mubr.f32.gmra.mrb[0].mxu0 %v240
    %v242 = vpop.f32.mrb[0].mxu0
    %v243 = vadd.f32 %v157, %v242
    %v244 = vpop.f32.mrb[0].mxu0
    %245 = vdwg.mxu0
    %246 = vmatprep.subr.mxu0 0.0
    %v247 = vand.u32 %v63, 4294901760
    %v248 = vsub.f32 %v63, %v247
    %249 = vmatpush1.msra.mxu0 %v248
    %250 = vmatprep.subr.mxu0 0.0
    %v251 = vand.u32 %v64, 4294901760
    %v252 = vsub.f32 %v64, %v251
    %253 = vmatpush1.msra.mxu0 %v252
    %254 = vmatprep.subr.mxu0 0.0
    %v255 = vand.u32 %v80, 4294901760
    %v256 = vsub.f32 %v80, %v255
    %257 = vmatpush1.msra.mxu0 %v256
    %258 = vmatprep.subr.mxu0 0.0
    %259 = vmatpush1.msra.mxu0 0.0
    %260 = vmatprep.subr.mxu0 0.0
    %261 = vmatpush1.msra.mxu0 0.0
    %262 = vmatprep.subr.mxu0 0.0
    %263 = vmatpush1.msra.mxu0 0.0
    %264 = vmatprep.subr.mxu0 0.0
    %265 = vmatpush1.msra.mxu0 0.0
    %266 = vmatprep.subr.mxu0 0.0
    %267 = vmatpush1.msra.mxu0 0.0
    %268 = vmatprep.subr.mxu0 0.0
    %269 = vmatpush1.msra.mxu0 0.0
    %270 = vmatprep.subr.mxu0 0.0
    %271 = vmatpush1.msra.mxu0 0.0
    %272 = vmatprep.subr.mxu0 0.0
    %273 = vmatpush1.msra.mxu0 0.0
    %274 = vmatprep.subr.mxu0 0.0
    %275 = vmatpush1.msra.mxu0 0.0
    %276 = vmatprep.subr.mxu0 0.0
    %277 = vmatpush1.msra.mxu0 0.0
    %278 = vmatprep.subr.mxu0 0.0
    %279 = vmatpush1.msra.mxu0 0.0
    %280 = vmatprep.subr.mxu0 0.0
    %281 = vmatpush1.msra.mxu0 0.0
    %282 = vmatprep.subr.mxu0 0.0
    %283 = vmatpush1.msra.mxu0 0.0
    %284 = vmatprep.subr.mxu0 0.0
    %285 = vmatpush1.msra.mxu0 0.0
    %286 = vmatprep.subr.mxu0 0.0
    %287 = vmatpush1.msra.mxu0 0.0
    %288 = vmatprep.subr.mxu0 0.0
    %289 = vmatpush1.msra.mxu0 0.0
    %290 = vmatprep.subr.mxu0 0.0
    %291 = vmatpush1.msra.mxu0 0.0
    %292 = vmatprep.subr.mxu0 0.0
    %293 = vmatpush1.msra.mxu0 0.0
    %294 = vmatprep.subr.mxu0 0.0
    %295 = vmatpush1.msra.mxu0 0.0
    %296 = vmatprep.subr.mxu0 0.0
    %297 = vmatpush1.msra.mxu0 0.0
    %298 = vmatprep.subr.mxu0 0.0
    %299 = vmatpush1.msra.mxu0 0.0
    %300 = vmatprep.subr.mxu0 0.0
    %301 = vmatpush1.msra.mxu0 0.0
    %302 = vmatprep.subr.mxu0 0.0
    %303 = vmatpush1.msra.mxu0 0.0
    %304 = vmatprep.subr.mxu0 0.0
    %305 = vmatpush1.msra.mxu0 0.0
    %306 = vmatprep.subr.mxu0 0.0
    %307 = vmatpush1.msra.mxu0 0.0
    %308 = vmatprep.subr.mxu0 0.0
    %309 = vmatpush1.msra.mxu0 0.0
    %310 = vmatprep.subr.mxu0 0.0
    %311 = vmatpush1.msra.mxu0 0.0
    %312 = vmatprep.subr.mxu0 0.0
    %313 = vmatpush1.msra.mxu0 0.0
    %314 = vmatprep.subr.mxu0 0.0
    %315 = vmatpush1.msra.mxu0 0.0
    %316 = vmatprep.mubr.f32.mxu0 0.0
    %v317 = vand.u32 %v76, 4294901760
    %v318 = vsub.f32 %v76, %v317
    %319 = vmatmul.mubr.f32.gmra.mrb[0].mxu0 %v318
    %v320 = vpop.f32.mrb[0].mxu0
    %v321 = vadd.f32 %v243, %v320
    %v322 = vpop.f32.mrb[0].mxu0
    %323 = vdwg.mxu0
    %324 = vmatprep.subr.mxu0 0.0
    %v325 = vand.u32 %v63, 4294901760
    %326 = vmatpush1.msra.mxu0 %v325
    %327 = vmatprep.subr.mxu0 0.0
    %v328 = vand.u32 %v64, 4294901760
    %329 = vmatpush1.msra.mxu0 %v328
    %330 = vmatprep.subr.mxu0 0.0
    %v331 = vand.u32 %v80, 4294901760
    %332 = vmatpush1.msra.mxu0 %v331
    %333 = vmatprep.subr.mxu0 0.0
    %334 = vmatpush1.msra.mxu0 0.0
    %335 = vmatprep.subr.mxu0 0.0
    %336 = vmatpush1.msra.mxu0 0.0
    %337 = vmatprep.subr.mxu0 0.0
    %338 = vmatpush1.msra.mxu0 0.0
    %339 = vmatprep.subr.mxu0 0.0
    %340 = vmatpush1.msra.mxu0 0.0
    %341 = vmatprep.subr.mxu0 0.0
    %342 = vmatpush1.msra.mxu0 0.0
    %343 = vmatprep.subr.mxu0 0.0
    %344 = vmatpush1.msra.mxu0 0.0
    %345 = vmatprep.subr.mxu0 0.0
    %346 = vmatpush1.msra.mxu0 0.0
    %347 = vmatprep.subr.mxu0 0.0
    %348 = vmatpush1.msra.mxu0 0.0
    %349 = vmatprep.subr.mxu0 0.0
    %350 = vmatpush1.msra.mxu0 0.0
    %351 = vmatprep.subr.mxu0 0.0
    %352 = vmatpush1.msra.mxu0 0.0
    %353 = vmatprep.subr.mxu0 0.0
    %354 = vmatpush1.msra.mxu0 0.0
    %355 = vmatprep.subr.mxu0 0.0
    %356 = vmatpush1.msra.mxu0 0.0
    %357 = vmatprep.subr.mxu0 0.0
    %358 = vmatpush1.msra.mxu0 0.0
    %359 = vmatprep.subr.mxu0 0.0
    %360 = vmatpush1.msra.mxu0 0.0
    %361 = vmatprep.subr.mxu0 0.0
    %362 = vmatpush1.msra.mxu0 0.0
    %363 = vmatprep.subr.mxu0 0.0
    %364 = vmatpush1.msra.mxu0 0.0
    %365 = vmatprep.subr.mxu0 0.0
    %366 = vmatpush1.msra.mxu0 0.0
    %367 = vmatprep.subr.mxu0 0.0
    %368 = vmatpush1.msra.mxu0 0.0
    %369 = vmatprep.subr.mxu0 0.0
    %370 = vmatpush1.msra.mxu0 0.0
    %371 = vmatprep.subr.mxu0 0.0
    %372 = vmatpush1.msra.mxu0 0.0
    %373 = vmatprep.subr.mxu0 0.0
    %374 = vmatpush1.msra.mxu0 0.0
    %375 = vmatprep.subr.mxu0 0.0
    %376 = vmatpush1.msra.mxu0 0.0
    %377 = vmatprep.subr.mxu0 0.0
    %378 = vmatpush1.msra.mxu0 0.0
    %379 = vmatprep.subr.mxu0 0.0
    %380 = vmatpush1.msra.mxu0 0.0
    %381 = vmatprep.subr.mxu0 0.0
    %382 = vmatpush1.msra.mxu0 0.0
    %383 = vmatprep.subr.mxu0 0.0
    %384 = vmatpush1.msra.mxu0 0.0
    %385 = vmatprep.subr.mxu0 0.0
    %386 = vmatpush1.msra.mxu0 0.0
    %387 = vmatprep.subr.mxu0 0.0
    %388 = vmatpush1.msra.mxu0 0.0
    %389 = vmatprep.subr.mxu0 0.0
    %390 = vmatpush1.msra.mxu0 0.0
    %391 = vmatprep.mubr.f32.mxu0 0.0
    %v392 = vand.u32 %v76, 4294901760
    %v393 = vsub.f32 %v76, %v392
    %v394 = vand.u32 %v393, 4294901760
    %395 = vmatmul.mubr.f32.gmra.mrb[0].mxu0 %v394
    %v396 = vpop.f32.mrb[0].mxu0
    %v397 = vadd.f32 %v321, %v396
    %v398 = vpop.f32.mrb[0].mxu0
    %399 = vdwg.mxu0
    %400 = vmatprep.subr.mxu0 0.0
    %v401 = vand.u32 %v63, 4294901760
    %v402 = vsub.f32 %v63, %v401
    %v403 = vand.u32 %v402, 4294901760
    %404 = vmatpush1.msra.mxu0 %v403
    %405 = vmatprep.subr.mxu0 0.0
    %v406 = vand.u32 %v64, 4294901760
    %v407 = vsub.f32 %v64, %v406
    %v408 = vand.u32 %v407, 4294901760
    %409 = vmatpush1.msra.mxu0 %v408
    %410 = vmatprep.subr.mxu0 0.0
    %v411 = vand.u32 %v80, 4294901760
    %v412 = vsub.f32 %v80, %v411
    %v413 = vand.u32 %v412, 4294901760
    %414 = vmatpush1.msra.mxu0 %v413
    %415 = vmatprep.subr.mxu0 0.0
    %416 = vmatpush1.msra.mxu0 0.0
    %417 = vmatprep.subr.mxu0 0.0
    %418 = vmatpush1.msra.mxu0 0.0
    %419 = vmatprep.subr.mxu0 0.0
    %420 = vmatpush1.msra.mxu0 0.0
    %421 = vmatprep.subr.mxu0 0.0
    %422 = vmatpush1.msra.mxu0 0.0
    %423 = vmatprep.subr.mxu0 0.0
    %424 = vmatpush1.msra.mxu0 0.0
    %425 = vmatprep.subr.mxu0 0.0
    %426 = vmatpush1.msra.mxu0 0.0
    %427 = vmatprep.subr.mxu0 0.0
    %428 = vmatpush1.msra.mxu0 0.0
    %429 = vmatprep.subr.mxu0 0.0
    %430 = vmatpush1.msra.mxu0 0.0
    %431 = vmatprep.subr.mxu0 0.0
    %432 = vmatpush1.msra.mxu0 0.0
    %433 = vmatprep.subr.mxu0 0.0
    %434 = vmatpush1.msra.mxu0 0.0
    %435 = vmatprep.subr.mxu0 0.0
    %436 = vmatpush1.msra.mxu0 0.0
    %437 = vmatprep.subr.mxu0 0.0
    %438 = vmatpush1.msra.mxu0 0.0
    %439 = vmatprep.subr.mxu0 0.0
    %440 = vmatpush1.msra.mxu0 0.0
    %441 = vmatprep.subr.mxu0 0.0
    %442 = vmatpush1.msra.mxu0 0.0
    %443 = vmatprep.subr.mxu0 0.0
    %444 = vmatpush1.msra.mxu0 0.0
    %445 = vmatprep.subr.mxu0 0.0
    %446 = vmatpush1.msra.mxu0 0.0
    %447 = vmatprep.subr.mxu0 0.0
    %448 = vmatpush1.msra.mxu0 0.0
    %449 = vmatprep.subr.mxu0 0.0
    %450 = vmatpush1.msra.mxu0 0.0
    %451 = vmatprep.subr.mxu0 0.0
    %452 = vmatpush1.msra.mxu0 0.0
    %453 = vmatprep.subr.mxu0 0.0
    %454 = vmatpush1.msra.mxu0 0.0
    %455 = vmatprep.subr.mxu0 0.0
    %456 = vmatpush1.msra.mxu0 0.0
    %457 = vmatprep.subr.mxu0 0.0
    %458 = vmatpush1.msra.mxu0 0.0
    %459 = vmatprep.subr.mxu0 0.0
    %460 = vmatpush1.msra.mxu0 0.0
    %461 = vmatprep.subr.mxu0 0.0
    %462 = vmatpush1.msra.mxu0 0.0
    %463 = vmatprep.subr.mxu0 0.0
    %464 = vmatpush1.msra.mxu0 0.0
    %465 = vmatprep.subr.mxu0 0.0
    %466 = vmatpush1.msra.mxu0 0.0
    %467 = vmatprep.subr.mxu0 0.0
    %468 = vmatpush1.msra.mxu0 0.0
    %469 = vmatprep.subr.mxu0 0.0
    %470 = vmatpush1.msra.mxu0 0.0
    %471 = vmatprep.subr.mxu0 0.0
    %472 = vmatpush1.msra.mxu0 0.0
    %473 = vmatprep.mubr.f32.mxu0 0.0
    %v474 = vand.u32 %v76, 4294901760
    %475 = vmatmul.mubr.f32.gmra.mrb[0].mxu0 %v474
    %v476 = vpop.f32.mrb[0].mxu0
    %v477 = vadd.f32 %v397, %v476
    %v478 = vpop.f32.mrb[0].mxu0
    %479 = vdwg.mxu0
    %480 = vmatprep.subr.mxu0 0.0
    %v481 = vand.u32 %v63, 4294901760
    %482 = vmatpush1.msra.mxu0 %v481
    %483 = vmatprep.subr.mxu0 0.0
    %v484 = vand.u32 %v64, 4294901760
    %485 = vmatpush1.msra.mxu0 %v484
    %486 = vmatprep.subr.mxu0 0.0
    %v487 = vand.u32 %v80, 4294901760
    %488 = vmatpush1.msra.mxu0 %v487
    %489 = vmatprep.subr.mxu0 0.0
    %490 = vmatpush1.msra.mxu0 0.0
    %491 = vmatprep.subr.mxu0 0.0
    %492 = vmatpush1.msra.mxu0 0.0
    %493 = vmatprep.subr.mxu0 0.0
    %494 = vmatpush1.msra.mxu0 0.0
    %495 = vmatprep.subr.mxu0 0.0
    %496 = vmatpush1.msra.mxu0 0.0
    %497 = vmatprep.subr.mxu0 0.0
    %498 = vmatpush1.msra.mxu0 0.0
    %499 = vmatprep.subr.mxu0 0.0
    %500 = vmatpush1.msra.mxu0 0.0
    %501 = vmatprep.subr.mxu0 0.0
    %502 = vmatpush1.msra.mxu0 0.0
    %503 = vmatprep.subr.mxu0 0.0
    %504 = vmatpush1.msra.mxu0 0.0
    %505 = vmatprep.subr.mxu0 0.0
    %506 = vmatpush1.msra.mxu0 0.0
    %507 = vmatprep.subr.mxu0 0.0
    %508 = vmatpush1.msra.mxu0 0.0
    %509 = vmatprep.subr.mxu0 0.0
    %510 = vmatpush1.msra.mxu0 0.0
    %511 = vmatprep.subr.mxu0 0.0
    %512 = vmatpush1.msra.mxu0 0.0
    %513 = vmatprep.subr.mxu0 0.0
    %514 = vmatpush1.msra.mxu0 0.0
    %515 = vmatprep.subr.mxu0 0.0
    %516 = vmatpush1.msra.mxu0 0.0
    %517 = vmatprep.subr.mxu0 0.0
    %518 = vmatpush1.msra.mxu0 0.0
    %519 = vmatprep.subr.mxu0 0.0
    %520 = vmatpush1.msra.mxu0 0.0
    %521 = vmatprep.subr.mxu0 0.0
    %522 = vmatpush1.msra.mxu0 0.0
    %523 = vmatprep.subr.mxu0 0.0
    %524 = vmatpush1.msra.mxu0 0.0
    %525 = vmatprep.subr.mxu0 0.0
    %526 = vmatpush1.msra.mxu0 0.0
    %527 = vmatprep.subr.mxu0 0.0
    %528 = vmatpush1.msra.mxu0 0.0
    %529 = vmatprep.subr.mxu0 0.0
    %530 = vmatpush1.msra.mxu0 0.0
    %531 = vmatprep.subr.mxu0 0.0
    %532 = vmatpush1.msra.mxu0 0.0
    %533 = vmatprep.subr.mxu0 0.0
    %534 = vmatpush1.msra.mxu0 0.0
    %535 = vmatprep.subr.mxu0 0.0
    %536 = vmatpush1.msra.mxu0 0.0
    %537 = vmatprep.subr.mxu0 0.0
    %538 = vmatpush1.msra.mxu0 0.0
    %539 = vmatprep.subr.mxu0 0.0
    %540 = vmatpush1.msra.mxu0 0.0
    %541 = vmatprep.subr.mxu0 0.0
    %542 = vmatpush1.msra.mxu0 0.0
    %543 = vmatprep.subr.mxu0 0.0
    %544 = vmatpush1.msra.mxu0 0.0
    %545 = vmatprep.subr.mxu0 0.0
    %546 = vmatpush1.msra.mxu0 0.0
    %547 = vmatprep.mubr.f32.mxu0 0.0
    %v548 = vand.u32 %v76, 4294901760
    %549 = vmatmul.mubr.f32.gmra.mrb[0].mxu0 %v548
    %v550 = vpop.f32.mrb[0].mxu0
    %v551 = vadd.f32 %v477, %v550
    %v552 = vpop.f32.mrb[0].mxu0
    %553 = vdwg.mxu0
    %v554 = vsel %vm74, %v60, -inf
    %555 = vmax.xlane.f32.xlu0 %v554
    %v556 = vpop.xlane.xlu0 %555
    %v557 = vsub.f32 %v60, %v556
    %v558 = vmul.f32 %v557, 1.442695
    %v559 = vpow.pop %v558
    %v560 = vsel %vm74, %v559, 0.0
    %561 = vadd.xlane.f32.xlu0 %v560
    %v562 = vpop.xlane.xlu0 %561
    %v563 = vlog2.pop %v562
    %v564 = vmul.f32 %v563, 0.6931472
    %v565 = vadd.f32 %v564, %v556
    %v566 = vmul.f32 %v73, %v60
    %v567 = vsel %vm74, %v566, 0.0
    %568 = vadd.xlane.f32.xlu0 %v567
    %v569 = vpop.xlane.xlu0 %568
    %v570 = vsub.f32 %v565, %v569
    %vm571 = vcmask 7168
    %v572 = vsel %vm571, %v570, 0.0
    %573 = vadd.xlane.f32.xlu0 %v572
    %v574 = vpop.xlane.xlu0 %573
    %v575 = vrot.slane %v574, 4
    %v576 = vadd.f32 %v574, %v575
    %v577 = vrot.slane %v576, 2
    %v578 = vadd.f32 %v576, %v577
    %v579 = vrot.slane %v578, 1
    %v580 = vadd.f32 %v578, %v579
    %s581 = vtos %v580
    %s582 = smul.f32 %s581, 0.125
    %vm583 = vcmask 48128
    %v584 = vsel %vm583, %v61, -inf
    %585 = vmax.xlane.f32.xlu0 %v584
    %v586 = vpop.xlane.xlu0 %585
    %v587 = vsub.f32 %v61, %v586
    %v588 = vmul.f32 %v587, 1.442695
    %v589 = vpow.pop %v588
    %v590 = vsel %vm583, %v589, 0.0
    %591 = vadd.xlane.f32.xlu0 %v590
    %v592 = vpop.xlane.xlu0 %591
    %v593 = vlog2.pop %v592
    %v594 = vmul.f32 %v593, 0.6931472
    %v595 = vadd.f32 %v594, %v586
    %597 = vrot.lane.b32.xlu0 %v61, 22
    %v598 = vpop.permute.xlu0 %597
    %v600 = vmul.f32 %v551, %v598
    %602 = vrot.lane.b32.xlu0 %v600, 106
    %v603 = vpop.permute.xlu0 %602
    %v605 = vsel %vm583, %v603, 0.0
    %606 = vadd.xlane.f32.xlu0 %v605
    %v607 = vpop.xlane.xlu0 %606
    %v608 = vsub.f32 %v595, %v607
    %v609 = vsel %vm571, %v608, 0.0
    %610 = vadd.xlane.f32.xlu0 %v609
    %v611 = vpop.xlane.xlu0 %610
    %v612 = vrot.slane %v611, 4
    %v613 = vadd.f32 %v611, %v612
    %v614 = vrot.slane %v613, 2
    %v615 = vadd.f32 %v613, %v614
    %v616 = vrot.slane %v615, 1
    %v617 = vadd.f32 %v615, %v616
    %s618 = vtos %v617
    %s619 = smul.f32 %s618, 0.125
    %v620 = vrcp.pop %v562
    %v621 = vmul.f32 %v559, %v620
    %v622 = vmul.f32 %v621, %v551
    %v623 = vsel %vm74, %v622, 0.0
    %624 = vadd.xlane.f32.xlu0 %v623
    %v625 = vpop.xlane.xlu0 %624
    %v626 = vrot.slane %v625, 4
    %v627 = vadd.f32 %v625, %v626
    %v628 = vrot.slane %v627, 2
    %v629 = vadd.f32 %v627, %v628
    %v630 = vrot.slane %v629, 1
    %v631 = vadd.f32 %v629, %v630
    %s632 = vtos %v631
    %s633 = smul.f32 %s632, 0.125
    %s634 = smul.f32 %s58, %s582
    %s635 = smul.f32 %s59, %s619
    %s636 = sadd.f32 %s634, %s635
    %s637 = smul.f32 %s633, 0.01
    %s638 = sadd.f32 %s636, %s637
    %s639 = scalar_lea.smem [#allocation9], 0
    %640 = sst [smem:[%s639]] %s638
    // Predicated region
    $region34: #{_distance_penalty_loss_impl.1} parent=1 // pred_check
      _
    $region35: #{_distance_penalty_loss_impl.1} parent=1 // pred_check_branch
      %642 = sbr.rel (0) target = $region37
    $region36: #{_distance_penalty_loss_impl.1} parent=1 // pred_region
      %s644 = ssub.s32 16, 16
      %645 = vsyncadd [#allocation4], %s644
      %648 = dma.smem_to_hbm [#allocation9], 16, %s5, [#allocation4]
    $region37: #{_distance_penalty_loss_impl.1} parent=1 // pred_fallthru
      _
    // Predicated region
    $region38: #{_distance_penalty_loss_impl.1} parent=1 // pred_check
      _
    $region39: #{_distance_penalty_loss_impl.1} parent=1 // pred_check_branch
      %650 = sbr.rel (0) target = $region41
    $region40: #{_distance_penalty_loss_impl.1} parent=1 // pred_region
      %651 = dma.done [#allocation4], 16
    $region41: #{_distance_penalty_loss_impl.1} parent=1 // pred_fallthru
      _
    %652 = sfence
    %653 = vsyncpa [#allocation3], 1
    %654 = vsyncpa [#allocation8], 1
    %655 = vsyncpa [#allocation4], 1
    %656 = vsyncpa [#allocation5], 1

</llo_original>
